<compile_context>
chip_gen: v6e
topology: v6e:2x2x1
jax: 0.10.0
libtpu: 0.0.40
codegen_flags: <defaults>
</compile_context>

<pallas_src>
import jax
import jax.numpy as jnp
from jax.experimental import pallas as pl
from jax.experimental.pallas import tpu as pltpu


_LEAKY_SLOPE = 0.01
_MIB = 1024 * 1024
_VMEM_BUFFER_BUDGET = 24 * _MIB     # per-step streamed/activation buffer budget
_VMEM_LIMIT_FLOOR = 16 * _MIB
_VMEM_LIMIT_CEIL = 44 * _MIB        # stays under v7x's 64 MiB physical VMEM
_ALIGN = 128                        # tile_b alignment (lane-dense output rows)


def _leaky_relu(x, slope=_LEAKY_SLOPE):
    return jnp.where(x > 0, x, slope * x)


def _round_up(x, m):
    return (x + m - 1) // m * m


def _lane_pad(n):   # last dim padded to 128 lanes in VMEM
    return _round_up(max(int(n), 1), 128)


def _sub_pad(n):    # second-to-last dim padded to 8 sublanes
    return _round_up(max(int(n), 1), 8)


def _step_target_and_semantics():
    """Per-generation HBM bytes-of-x-per-step target + grid semantics."""
    try:
        kind = jax.devices()[0].device_kind.lower()
    except Exception:
        kind = ""
    if "v7" in kind:
        # 2 TensorCores/chip: shard the batch grid axis across them and aim
        # for >=4-8 MB per step per core (the VMEM cap below trims this).
        return 6 * _MIB, (pltpu.CORE_PARALLEL,)
    if "v5 lite" in kind or "v5lite" in kind or "v5e" in kind:
        # ~0.8 TB/s roofline: 1-2 MB/step already amortizes the step overhead.
        return 3 * _MIB // 2, ("parallel",)
    # v6e / v5p / default.
    return 3 * _MIB, ("parallel",)


def _per_row_vmem_bytes(S, P, x_bytes, packed):
    """Conservative VMEM bytes per batch row (lane/sublane padded)."""
    if packed:
        per_packed_row = (
            2 * P * S * x_bytes             # x block, double-buffered, dense
            + 2 * _lane_pad(P * 64) * 4     # h1 (+ one temp copy)
            + 2 * _lane_pad(P * 8) * 4      # h2 (+ one temp copy)
            + 2 * _lane_pad(P) * 4)         # out block, double-buffered
        return max(1, per_packed_row // P)
    return (2 * _lane_pad(S) * x_bytes      # x block (lane-padded S -> 128)
            + 2 * _lane_pad(64) * 4         # h1
            + 2 * _lane_pad(8) * 4          # h2
            + 2 * 4)                        # (1, tile_b) lane-dense out


def _weight_vmem_bytes(S, P, w_bytes, packed):
    if packed:
        n = (_sub_pad(P * S) * _lane_pad(P * 64) + _lane_pad(P * 64)
             + _sub_pad(P * 64) * _lane_pad(P * 8) + _lane_pad(P * 8)
             + _sub_pad(P * 8) * _lane_pad(P))
    else:
        n = (_sub_pad(S) * _lane_pad(64) + _lane_pad(64)
             + _sub_pad(64) * _lane_pad(8) + _lane_pad(8) + _lane_pad(8))
    return 2 * n * w_bytes   # counted double-buffered (constant index maps)


def _critic_plain_kernel(x_ref, w1_ref, b1_ref, w2_ref, b2_ref, w3_ref, b3_ref,
                         out_ref):
    """(tile_b, S) batch block -> lane-dense (1, tile_b) values."""
    x = x_ref[...]
    h1 = _leaky_relu(
        jnp.dot(x, w1_ref[...], preferred_element_type=jnp.float32)
        + b1_ref[...])
    h2 = _leaky_relu(
        jnp.dot(h1.astype(w2_ref.dtype), w2_ref[...],
                preferred_element_type=jnp.float32) + b2_ref[...])
    # 8 -> 1 head: elementwise mul + lane reduce; b3 is a scalar from SMEM.
    v = jnp.sum(h2 * w3_ref[...], axis=-1) + b3_ref[0, 0]
    out_ref[...] = v[None, :].astype(out_ref.dtype)


def _critic_packed_kernel(xp_ref, w1_ref, b1_ref, w2_ref, b2_ref, w3_ref,
                          b3_ref, out_ref):
    """(rows, 128) lane-dense block holding P consecutive states per row.

    Weights are block-diagonal expansions kron(I_P, W), so each S-lane group
    flows through its own copy of the MLP with no in-kernel relayout.
    """
    h1 = _leaky_relu(
        jnp.dot(xp_ref[...], w1_ref[...],
                preferred_element_type=jnp.float32) + b1_ref[...])
    h2 = _leaky_relu(
        jnp.dot(h1.astype(w2_ref.dtype), w2_ref[...],
                preferred_element_type=jnp.float32) + b2_ref[...])
    v = jnp.dot(h2.astype(w3_ref.dtype), w3_ref[...],
                preferred_element_type=jnp.float32) + b3_ref[0, 0]
    out_ref[...] = v.astype(out_ref.dtype)              # (rows, P)


def critic_forward(x, params, *, tile_b=None):
    """x: (B, state_dim) -> (B, 1) state values (matches the PyTorch Critic).

    For bf16 execution pass x and params already cast upstream; this wrapper
    never re-casts (that would be an extra HBM pass on the dominant stream).
    """
    B, S = x.shape
    x_bytes = jnp.dtype(x.dtype).itemsize
    w_bytes = jnp.dtype(params["w1"].dtype).itemsize

    # Lane-dense packing factor: P states per 128-lane row (free row-major
    # reshape).  Fall back to the plain layout when it does not apply.
    P = 128 // S if (S <= 128 and 128 % S == 0) else 1
    packed = (P > 1) and (P <= 16) and (B % P == 0)
    if not packed:
        P = 1

    # ---- tile size: target HBM bytes of x per grid step, capped by VMEM ----
    target_bytes, dim_sems = _step_target_and_semantics()
    if tile_b is None:
        tile_b = max(_ALIGN, target_bytes // max(S * x_bytes, 1))
    per_row = _per_row_vmem_bytes(S, P, x_bytes, packed)
    w_vmem = _weight_vmem_bytes(S, P, w_bytes, packed)
    row_cap = max(_ALIGN, (_VMEM_BUFFER_BUDGET - w_vmem) // per_row)
    tile_b = int(min(int(tile_b), row_cap, _round_up(B, _ALIGN)))
    tile_b = max(_ALIGN, tile_b // _ALIGN * _ALIGN)

    vmem_est = w_vmem + tile_b * per_row
    vmem_limit = int(min(max(3 * vmem_est // 2, _VMEM_LIMIT_FLOOR),
                         _VMEM_LIMIT_CEIL))
    compiler_params = pltpu.CompilerParams(
        dimension_semantics=dim_sems, vmem_limit_bytes=vmem_limit)

    if packed:
        # Block-diagonal weight expansion (tiny, built on the fly).
        eye = jnp.eye(P, dtype=params["w1"].dtype)
        w1p = jnp.kron(eye, params["w1"])            # (P*S=128, P*64)
        b1p = jnp.tile(params["b1"], (1, P))         # (1, P*64)
        w2p = jnp.kron(eye, params["w2"])            # (P*64, P*8)
        b2p = jnp.tile(params["b2"], (1, P))         # (1, P*8)
        w3p = jnp.kron(eye, params["w3"].T)          # (P*8, P)

        xp = x.reshape(B // P, P * S)                # free metadata reshape
        rows_total = B // P
        rows_pb = tile_b // P
        grid = (pl.cdiv(rows_total, rows_pb),)       # ragged last block OK

        grid_spec = pltpu.PrefetchScalarGridSpec(
            num_scalar_prefetch=0,
            grid=grid,
            in_specs=[
                pl.BlockSpec((rows_pb, P * S), lambda i: (i, 0)),   # x: streamed
                pl.BlockSpec((P * S, P * 64), lambda i: (0, 0)),    # w1: resident
                pl.BlockSpec((1, P * 64), lambda i: (0, 0)),        # b1
                pl.BlockSpec((P * 64, P * 8), lambda i: (0, 0)),    # w2
                pl.BlockSpec((1, P * 8), lambda i: (0, 0)),         # b2
                pl.BlockSpec((P * 8, P), lambda i: (0, 0)),         # w3
                pl.BlockSpec(memory_space=pltpu.MemorySpace.SMEM),  # b3 scalar
            ],
            out_specs=pl.BlockSpec((rows_pb, P), lambda i: (i, 0)),
        )
        out = pl.pallas_call(
            _critic_packed_kernel,
            out_shape=jax.ShapeDtypeStruct((rows_total, P), jnp.float32),
            grid_spec=grid_spec,
            compiler_params=compiler_params,
        )(xp, w1p, b1p, w2p, b2p, w3p, params["b3"])
    else:
        grid = (pl.cdiv(B, tile_b),)                 # ragged last block OK
        grid_spec = pltpu.PrefetchScalarGridSpec(
            num_scalar_prefetch=0,
            grid=grid,
            in_specs=[
                pl.BlockSpec((tile_b, S), lambda i: (i, 0)),        # x: streamed
                pl.BlockSpec((S, 64), lambda i: (0, 0)),            # w1: resident
                pl.BlockSpec((1, 64), lambda i: (0, 0)),            # b1
                pl.BlockSpec((64, 8), lambda i: (0, 0)),            # w2
                pl.BlockSpec((1, 8), lambda i: (0, 0)),             # b2
                pl.BlockSpec((1, 8), lambda i: (0, 0)),             # w3 (1x8 row)
                pl.BlockSpec(memory_space=pltpu.MemorySpace.SMEM),  # b3 scalar
            ],
            out_specs=pl.BlockSpec((1, tile_b), lambda i: (0, i)),
        )
        out = pl.pallas_call(
            _critic_plain_kernel,
            out_shape=jax.ShapeDtypeStruct((1, B), jnp.float32),
            grid_spec=grid_spec,
            compiler_params=compiler_params,
        )(x, params["w1"], params["b1"], params["w2"], params["b2"],
          params["w3"], params["b3"])

    # Packed (B/P, P) and plain (1, B) outputs both reshape to (B, 1) for free.
    return out.reshape(B, 1)


def init_params(key, state_dim):
    """Deterministic init matching nn.Linear's U(-1/sqrt(fan_in), ...)."""
    ks = jax.random.split(key, 6)

    def linear(kw, kb, fan_in, fan_out, row_major_out=False):
        bound = 1.0 / jnp.sqrt(jnp.float32(fan_in))
        shape = (fan_out, fan_in) if row_major_out else (fan_in, fan_out)
        w = jax.random.uniform(kw, shape, jnp.float32, -bound, bound)
        b = jax.random.uniform(kb, (1, fan_out), jnp.float32, -bound, bound)
        return w, b

    w1, b1 = linear(ks[0], ks[1], state_dim, 64)
    w2, b2 = linear(ks[2], ks[3], 64, 8)
    w3, b3 = linear(ks[4], ks[5], 8, 1, row_major_out=True)   # (1, 8), (1, 1)
    return {"w1": w1, "b1": b1, "w2": w2, "b2": b2, "w3": w3, "b3": b3}


def critic_reference(x, p):
    h1 = jax.nn.leaky_relu(x @ p["w1"] + p["b1"], negative_slope=_LEAKY_SLOPE)
    h2 = jax.nn.leaky_relu(h1 @ p["w2"] + p["b2"], negative_slope=_LEAKY_SLOPE)
    return h2 @ p["w3"].T + p["b3"]


if __name__ == "__main__":
    key = jax.random.PRNGKey(0)
    kx1, kx2, kx3, kp = jax.random.split(key, 4)

    state_dim = 32
    params = init_params(kp, state_dim)

    # 1) Small batch, single block, lane-dense packed path (S=32 -> P=4).
    x1 = jax.random.normal(kx1, (8, state_dim), dtype=jnp.float32)
    v1 = jax.block_until_ready(critic_forward(x1, params))
    r1 = critic_reference(x1, params)
    assert v1.shape == (8, 1), v1.shape
    assert jnp.allclose(v1, r1, atol=2e-5, rtol=2e-5), (v1, r1)

    # 2) Multi-block packed path with a ragged last block (300 rows, tile 128).
    x2 = jax.random.normal(kx2, (300, state_dim), dtype=jnp.float32)
    v2 = jax.block_until_ready(critic_forward(x2, params, tile_b=128))
    r2 = critic_reference(x2, params)
    assert v2.shape == (300, 1), v2.shape
    assert jnp.allclose(v2, r2, atol=2e-5, rtol=2e-5)

    # 3) Fallback (plain) path: batch not a multiple of P -> ragged lane-dense
    #    (1, B) output block.
    x3 = jax.random.normal(kx3, (10, state_dim), dtype=jnp.float32)
    v3 = jax.block_until_ready(critic_forward(x3, params))
    r3 = critic_reference(x3, params)
    assert v3.shape == (10, 1), v3.shape
    assert jnp.allclose(v3, r3, atol=2e-5, rtol=2e-5)

    print("KERNEL_OK")
</pallas_src>

<mosaic_0001>
module attributes {stable_mosaic.version = 11 : i64} {
  func.func @_critic_packed_kernel(%arg0: i32, %arg1: memref<32x128xf32, #tpu.memory_space<vmem>>, %arg2: memref<128x256xf32, #tpu.memory_space<vmem>>, %arg3: memref<1x256xf32, #tpu.memory_space<vmem>>, %arg4: memref<256x32xf32, #tpu.memory_space<vmem>>, %arg5: memref<1x32xf32, #tpu.memory_space<vmem>>, %arg6: memref<32x4xf32, #tpu.memory_space<vmem>>, %arg7: memref<1x1xf32, #tpu.memory_space<smem>>, %arg8: memref<32x4xf32, #tpu.memory_space<vmem>>) attributes {dimension_semantics = [#tpu.dimension_semantics<parallel>], iteration_bounds = array<i64: 1>, scalar_prefetch = 0 : i64, scratch_operands = 0 : i64, tpu.core_type = #tpu.core_type<tc>, window_params = [{transform_indices = @transform_0, window_bounds = array<i64: 32, 128>}, {pipeline_mode = #tpu.pipeline_mode<synchronous>, transform_indices = @transform_1, window_bounds = array<i64: 128, 256>}, {pipeline_mode = #tpu.pipeline_mode<synchronous>, transform_indices = @transform_2, window_bounds = array<i64: 1, 256>}, {pipeline_mode = #tpu.pipeline_mode<synchronous>, transform_indices = @transform_3, window_bounds = array<i64: 256, 32>}, {pipeline_mode = #tpu.pipeline_mode<synchronous>, transform_indices = @transform_4, window_bounds = array<i64: 1, 32>}, {pipeline_mode = #tpu.pipeline_mode<synchronous>, transform_indices = @transform_5, window_bounds = array<i64: 32, 4>}, {transform_indices = @transform_6, window_bounds = array<i64: 1, 1>}, {transform_indices = @transform_7, window_bounds = array<i64: 32, 4>}]} {
    %c0 = arith.constant 0 : index
    %c0_0 = arith.constant 0 : index
    %0 = vector.load %arg1[%c0, %c0_0] : memref<32x128xf32, #tpu.memory_space<vmem>>, vector<32x128xf32>
    %c0_1 = arith.constant 0 : index
    %c0_2 = arith.constant 0 : index
    %1 = vector.load %arg2[%c0_1, %c0_2] : memref<128x256xf32, #tpu.memory_space<vmem>>, vector<128x256xf32>
    %cst = arith.constant dense<0.000000e+00> : vector<32x256xf32>
    %2 = tpu.matmul %0, %1, %cst {dimension_numbers = #tpu.dot_dimension_numbers<[1], [0], [0], [1], [0, 0, 1, 1], [], []>} : vector<32x128xf32>, vector<128x256xf32>, vector<32x256xf32> -> vector<32x256xf32>
    %c0_3 = arith.constant 0 : index
    %c0_4 = arith.constant 0 : index
    %3 = vector.load %arg3[%c0_3, %c0_4] : memref<1x256xf32, #tpu.memory_space<vmem>>, vector<1x256xf32>
    %4 = vector.broadcast %3 : vector<1x256xf32> to vector<32x256xf32>
    %5 = arith.addf %2, %4 : vector<32x256xf32>
    %cst_5 = arith.constant 0.000000e+00 : f32
    %6 = vector.broadcast %cst_5 : f32 to vector<32x256xf32>
    %7 = arith.cmpf ogt, %5, %6 : vector<32x256xf32>
    %cst_6 = arith.constant 0.00999999977 : f32
    %8 = vector.broadcast %cst_6 : f32 to vector<32x256xf32>
    %9 = arith.mulf %8, %5 : vector<32x256xf32>
    %10 = arith.select %7, %5, %9 : vector<32x256xi1>, vector<32x256xf32>
    %c0_7 = arith.constant 0 : index
    %c0_8 = arith.constant 0 : index
    %11 = vector.load %arg4[%c0_7, %c0_8] : memref<256x32xf32, #tpu.memory_space<vmem>>, vector<256x32xf32>
    %cst_9 = arith.constant dense<0.000000e+00> : vector<32x32xf32>
    %12 = tpu.matmul %10, %11, %cst_9 {dimension_numbers = #tpu.dot_dimension_numbers<[1], [0], [0], [1], [0, 0, 1, 1], [], []>} : vector<32x256xf32>, vector<256x32xf32>, vector<32x32xf32> -> vector<32x32xf32>
    %c0_10 = arith.constant 0 : index
    %c0_11 = arith.constant 0 : index
    %13 = vector.load %arg5[%c0_10, %c0_11] : memref<1x32xf32, #tpu.memory_space<vmem>>, vector<1x32xf32>
    %14 = vector.broadcast %13 : vector<1x32xf32> to vector<32x32xf32>
    %15 = arith.addf %12, %14 : vector<32x32xf32>
    %cst_12 = arith.constant 0.000000e+00 : f32
    %16 = vector.broadcast %cst_12 : f32 to vector<32x32xf32>
    %17 = arith.cmpf ogt, %15, %16 : vector<32x32xf32>
    %cst_13 = arith.constant 0.00999999977 : f32
    %18 = vector.broadcast %cst_13 : f32 to vector<32x32xf32>
    %19 = arith.mulf %18, %15 : vector<32x32xf32>
    %20 = arith.select %17, %15, %19 : vector<32x32xi1>, vector<32x32xf32>
    %c0_14 = arith.constant 0 : index
    %c0_15 = arith.constant 0 : index
    %21 = vector.load %arg6[%c0_14, %c0_15] : memref<32x4xf32, #tpu.memory_space<vmem>>, vector<32x4xf32>
    %cst_16 = arith.constant dense<0.000000e+00> : vector<32x4xf32>
    %22 = tpu.matmul %20, %21, %cst_16 {dimension_numbers = #tpu.dot_dimension_numbers<[1], [0], [0], [1], [0, 0, 1, 1], [], []>} : vector<32x32xf32>, vector<32x4xf32>, vector<32x4xf32> -> vector<32x4xf32>
    %c0_17 = arith.constant 0 : index
    %c0_18 = arith.constant 0 : index
    %23 = memref.load %arg7[%c0_17, %c0_18] : memref<1x1xf32, #tpu.memory_space<smem>>
    %24 = vector.broadcast %23 : f32 to vector<32x4xf32>
    %25 = arith.addf %22, %24 : vector<32x4xf32>
    %c0_19 = arith.constant 0 : index
    %c0_20 = arith.constant 0 : index
    %26 = vector.load %arg8[%c0_19, %c0_20] : memref<32x4xf32, #tpu.memory_space<vmem>>, vector<32x4xf32>
    tpu.vector_store %arg8[%c0_19, %c0_20], %25 {strides = array<i32>} : memref<32x4xf32, #tpu.memory_space<vmem>>, vector<32x4xf32>,
    return
  }
  func.func @transform_0(%arg0: i32) -> (i32, i32) {
    %c0_i32 = arith.constant 0 : i32
    %c0_i32_0 = arith.constant 0 : i32
    return %arg0, %c0_i32 : i32, i32
  }
  func.func @transform_1(%arg0: i32) -> (i32, i32) {
    %c0_i32 = arith.constant 0 : i32
    %c0_i32_0 = arith.constant 0 : i32
    %c0_i32_1 = arith.constant 0 : i32
    return %c0_i32, %c0_i32_0 : i32, i32
  }
  func.func @transform_2(%arg0: i32) -> (i32, i32) {
    %c0_i32 = arith.constant 0 : i32
    %c0_i32_0 = arith.constant 0 : i32
    %c0_i32_1 = arith.constant 0 : i32
    return %c0_i32, %c0_i32_0 : i32, i32
  }
  func.func @transform_3(%arg0: i32) -> (i32, i32) {
    %c0_i32 = arith.constant 0 : i32
    %c0_i32_0 = arith.constant 0 : i32
    %c0_i32_1 = arith.constant 0 : i32
    return %c0_i32, %c0_i32_0 : i32, i32
  }
  func.func @transform_4(%arg0: i32) -> (i32, i32) {
    %c0_i32 = arith.constant 0 : i32
    %c0_i32_0 = arith.constant 0 : i32
    %c0_i32_1 = arith.constant 0 : i32
    return %c0_i32, %c0_i32_0 : i32, i32
  }
  func.func @transform_5(%arg0: i32) -> (i32, i32) {
    %c0_i32 = arith.constant 0 : i32
    %c0_i32_0 = arith.constant 0 : i32
    %c0_i32_1 = arith.constant 0 : i32
    return %c0_i32, %c0_i32_0 : i32, i32
  }
  func.func @transform_6(%arg0: i32) -> (i32, i32) {
    %c0_i32 = arith.constant 0 : i32
    %c0_i32_0 = arith.constant 0 : i32
    %c0_i32_1 = arith.constant 0 : i32
    return %c0_i32, %c0_i32_0 : i32, i32
  }
  func.func @transform_7(%arg0: i32) -> (i32, i32) {
    %c0_i32 = arith.constant 0 : i32
    %c0_i32_0 = arith.constant 0 : i32
    return %arg0, %c0_i32 : i32, i32
  }
}

</mosaic_0001>

<llo_original>
// kernel: tpu_custom_call.1
$region0: #{tpu_custom_call.1}
  #allocation0 [shape = 'u32[]', space=smem, size = 0x4, offset = 0x4, fixed_abs, tag = 'smem constant byte address 0x4 - core index']
  #allocation1 [shape = 'u32[144,128]{1,0:T(1,128)}', space=vmem, size = 0x12000, scoped, tag = 'internal scratch']
  #allocation2 [shape = 'f32[1,1]{1,0:T(1,128)S(6)}', space=smem, size = 0x200, scoped, tag = 'scoped memory for tpu_custom_call.1']
  %s0 = inlined_call_operand.vmem [shape: f32[2,128], index: 0, kind: input, shape index: {}]
  %s1 = inlined_call_operand.vmem [shape: f32[128,256], index: 1, kind: input, shape index: {}]
  %s2 = inlined_call_operand.vmem [shape: f32[1,256], index: 2, kind: input, shape index: {}]
  %s3 = inlined_call_operand.vmem [shape: f32[256,32], index: 3, kind: input, shape index: {}]
  %s4 = inlined_call_operand.vmem [shape: f32[1,32], index: 4, kind: input, shape index: {}]
  %s5 = inlined_call_operand.vmem [shape: f32[32,4], index: 5, kind: input, shape index: {}]
  %s6 = inlined_call_operand.<no memory space> [shape: f32[1,1], index: 6, kind: input, shape index: {}]
  %s7 = inlined_call_operand.hbm [shape: f32[2,4], index: 7, kind: output, shape index: {}]
  %s8 = sld [smem:[#allocation0]]
  $region38: #{tpu_custom_call.1} parent=0
    _
  %s10 = ssub.s32 1, %s8
  %s11 = scalar_select 0, %s10, %s8
  %12 = sst [smem:[#allocation2]] %s6
  $region1: #{tpu_custom_call.1} parent=0
    #allocation3 [shape = 'u8[16384]{0}', space=vmem, size = 0x4000, scoped, tag = 'output window, operand 0, single buffered']
    #allocation4 [shape = 's32[1]{0}', space=sflag, size = 0x4, scoped, tag = 'scoped memory for tpu_custom_call.1']
    %13 = vsyncpa [#allocation4], 0
    // Predicated region
    $region2: #{tpu_custom_call.1} parent=1 // pred_check
      _
    $region3: #{tpu_custom_call.1} parent=1 // pred_check_branch
      %15 = sbr.rel (0) target = $region5
    $region4: #{tpu_custom_call.1} parent=1 // pred_region
      _
    $region5: #{tpu_custom_call.1} parent=1 // pred_fallthru
      _
    // Predicated region
    $region6: #{tpu_custom_call.1} parent=1 // pred_check
      _
    $region7: #{tpu_custom_call.1} parent=1 // pred_check_branch
      %17 = sbr.rel (0) target = $region9
    $region8: #{tpu_custom_call.1} parent=1 // pred_region
      _
    $region9: #{tpu_custom_call.1} parent=1 // pred_fallthru
      _
    // Predicated region
    $region10: #{tpu_custom_call.1} parent=1 // pred_check
      _
    $region11: #{tpu_custom_call.1} parent=1 // pred_check_branch
      %19 = sbr.rel (0) target = $region13
    $region12: #{tpu_custom_call.1} parent=1 // pred_region
      _
    $region13: #{tpu_custom_call.1} parent=1 // pred_fallthru
      _
    // Predicated region
    $region14: #{tpu_custom_call.1} parent=1 // pred_check
      _
    $region15: #{tpu_custom_call.1} parent=1 // pred_check_branch
      %21 = sbr.rel (0) target = $region17
    $region16: #{tpu_custom_call.1} parent=1 // pred_region
      _
    $region17: #{tpu_custom_call.1} parent=1 // pred_fallthru
      _
    // Predicated region
    $region18: #{tpu_custom_call.1} parent=1 // pred_check
      _
    $region19: #{tpu_custom_call.1} parent=1 // pred_check_branch
      %23 = sbr.rel (0) target = $region21
    $region20: #{tpu_custom_call.1} parent=1 // pred_region
      _
    $region21: #{tpu_custom_call.1} parent=1 // pred_fallthru
      _
    // Predicated region
    $region22: #{tpu_custom_call.1} parent=1 // pred_check
      _
    $region23: #{tpu_custom_call.1} parent=1 // pred_check_branch
      %25 = sbr.rel (0) target = $region25
    $region24: #{tpu_custom_call.1} parent=1 // pred_region
      _
    $region25: #{tpu_custom_call.1} parent=1 // pred_fallthru
      _
    // Predicated region
    $region26: #{tpu_custom_call.1} parent=1 // pred_check
      _
    $region27: #{tpu_custom_call.1} parent=1 // pred_check_branch
      %27 = sbr.rel (0) target = $region29
    $region28: #{tpu_custom_call.1} parent=1 // pred_region
      _
    $region29: #{tpu_custom_call.1} parent=1 // pred_fallthru
      _
    %v28 = vld [vmem:[%s0] sm:$0xff]
    %v29 = vld [vmem:[%s0 + $0x8] sm:$0xff]
    %v30 = vld [vmem:[%s0 + $0x10] sm:$0xff]
    %v31 = vld [vmem:[%s0 + $0x18] sm:$0xff]
    %v32 = vld [vmem:[%s1] sm:$0xff]
    %v33 = vld [vmem:[%s1 + $0x8] sm:$0xff]
    %v34 = vld [vmem:[%s1 + $0x10] sm:$0xff]
    %v35 = vld [vmem:[%s1 + $0x18] sm:$0xff]
    %v36 = vld [vmem:[%s1 + $0x20] sm:$0xff]
    %v37 = vld [vmem:[%s1 + $0x28] sm:$0xff]
    %v38 = vld [vmem:[%s1 + $0x30] sm:$0xff]
    %v39 = vld [vmem:[%s1 + $0x38] sm:$0xff]
    %v40 = vld [vmem:[%s1 + $0x40] sm:$0xff]
    %v41 = vld [vmem:[%s1 + $0x48] sm:$0xff]
    %v42 = vld [vmem:[%s1 + $0x50] sm:$0xff]
    %v43 = vld [vmem:[%s1 + $0x58] sm:$0xff]
    %v44 = vld [vmem:[%s1 + $0x60] sm:$0xff]
    %v45 = vld [vmem:[%s1 + $0x68] sm:$0xff]
    %v46 = vld [vmem:[%s1 + $0x70] sm:$0xff]
    %v47 = vld [vmem:[%s1 + $0x78] sm:$0xff]
    %v48 = vld [vmem:[%s1 + $0x80] sm:$0xff]
    %v49 = vld [vmem:[%s1 + $0x88] sm:$0xff]
    %v50 = vld [vmem:[%s1 + $0x90] sm:$0xff]
    %v51 = vld [vmem:[%s1 + $0x98] sm:$0xff]
    %v52 = vld [vmem:[%s1 + $0xa0] sm:$0xff]
    %v53 = vld [vmem:[%s1 + $0xa8] sm:$0xff]
    %v54 = vld [vmem:[%s1 + $0xb0] sm:$0xff]
    %v55 = vld [vmem:[%s1 + $0xb8] sm:$0xff]
    %v56 = vld [vmem:[%s1 + $0xc0] sm:$0xff]
    %v57 = vld [vmem:[%s1 + $0xc8] sm:$0xff]
    %v58 = vld [vmem:[%s1 + $0xd0] sm:$0xff]
    %v59 = vld [vmem:[%s1 + $0xd8] sm:$0xff]
    %v60 = vld [vmem:[%s1 + $0xe0] sm:$0xff]
    %v61 = vld [vmem:[%s1 + $0xe8] sm:$0xff]
    %v62 = vld [vmem:[%s1 + $0xf0] sm:$0xff]
    %v63 = vld [vmem:[%s1 + $0xf8] sm:$0xff]
    %v64 = vld [vmem:[%s2] sm:$0x3]
    %v66 = vlaneseq
    %v67 = vshrl.u32 %v66, 7
    %v68 = vsub.s32 0, %v67
    %v69 = vrot.slane %v64, %v68
    %v70 = vlaneseq
    %v71 = vshrl.u32 %v70, 7
    %v72 = vsub.s32 1, %v71
    %v73 = vrot.slane %v64, %v72
    %76 = vmatprep.subr.mxu0 %v63
    %77 = vmatpush1.msra.mxu0 %v62
    %78 = vmatprep.subr.mxu0 %v61
    %79 = vmatpush1.msra.mxu0 %v60
    %80 = vmatprep.subr.mxu0 %v59
    %81 = vmatpush1.msra.mxu0 %v58
    %82 = vmatprep.subr.mxu0 %v57
    %83 = vmatpush1.msra.mxu0 %v56
    %84 = vmatprep.subr.mxu0 %v55
    %85 = vmatpush1.msra.mxu0 %v54
    %86 = vmatprep.subr.mxu0 %v53
    %87 = vmatpush1.msra.mxu0 %v52
    %88 = vmatprep.subr.mxu0 %v51
    %89 = vmatpush1.msra.mxu0 %v50
    %90 = vmatprep.subr.mxu0 %v49
    %91 = vmatpush1.msra.mxu0 %v48
    %92 = vmatprep.subr.mxu0 %v47
    %93 = vmatpush1.msra.mxu0 %v46
    %94 = vmatprep.subr.mxu0 %v45
    %95 = vmatpush1.msra.mxu0 %v44
    %96 = vmatprep.subr.mxu0 %v43
    %97 = vmatpush1.msra.mxu0 %v42
    %98 = vmatprep.subr.mxu0 %v41
    %99 = vmatpush1.msra.mxu0 %v40
    %100 = vmatprep.subr.mxu0 %v39
    %101 = vmatpush1.msra.mxu0 %v38
    %102 = vmatprep.subr.mxu0 %v37
    %103 = vmatpush1.msra.mxu0 %v36
    %104 = vmatprep.subr.mxu0 %v35
    %105 = vmatpush1.msra.mxu0 %v34
    %106 = vmatprep.subr.mxu0 %v33
    %107 = vmatpush1.msra.mxu0 %v32
    %108 = vmatprep.subr.mxu0 0.0
    %109 = vmatpush2.msra.mxu0 0.0
    %110 = vmatprep.subr.mxu0 0.0
    %111 = vmatpush2.msra.mxu0 0.0
    %112 = vmatprep.subr.mxu0 0.0
    %113 = vmatpush2.msra.mxu0 0.0
    %114 = vmatprep.subr.mxu0 0.0
    %115 = vmatpush2.msra.mxu0 0.0
    %116 = vmatprep.subr.mxu0 0.0
    %117 = vmatpush2.msra.mxu0 0.0
    %118 = vmatprep.subr.mxu0 0.0
    %119 = vmatpush2.msra.mxu0 0.0
    %120 = vmatprep.subr.mxu0 0.0
    %121 = vmatpush2.msra.mxu0 0.0
    %122 = vmatprep.subr.mxu0 0.0
    %123 = vmatpush2.msra.mxu0 0.0
    %124 = vmatprep.subr.mxu0 0.0
    %125 = vmatpush2.msra.mxu0 0.0
    %126 = vmatprep.subr.mxu0 0.0
    %127 = vmatpush2.msra.mxu0 0.0
    %128 = vmatprep.subr.mxu0 0.0
    %129 = vmatpush2.msra.mxu0 0.0
    %130 = vmatprep.subr.mxu0 0.0
    %131 = vmatpush2.msra.mxu0 0.0
    %132 = vmatprep.subr.mxu0 0.0
    %133 = vmatpush2.msra.mxu0 0.0
    %134 = vmatprep.subr.mxu0 0.0
    %135 = vmatpush2.msra.mxu0 0.0
    %136 = vmatprep.subr.mxu0 0.0
    %137 = vmatpush2.msra.mxu0 0.0
    %138 = vmatprep.subr.mxu0 0.0
    %139 = vmatpush2.msra.mxu0 0.0
    %140 = vmatprep.mubr.f32.mxu0 0.0
    %141 = vmatmul.mubr.f32.gmra.mxu0 %v28
    %v142 = vpop.f32.mrf.mxu0
    %v143 = vadd.f32 %v69, %v142
    %v144 = vpop.f32.mrf.mxu0
    %v145 = vadd.f32 %v73, %v144
    %146 = vmatprep.mubr.f32.mxu0 0.0
    %147 = vmatmul.mubr.f32.gmra.mxu0 %v29
    %v148 = vpop.f32.mrf.mxu0
    %v149 = vadd.f32 %v69, %v148
    %v150 = vpop.f32.mrf.mxu0
    %v151 = vadd.f32 %v73, %v150
    %152 = vmatprep.mubr.f32.mxu0 0.0
    %153 = vmatmul.mubr.f32.gmra.mxu0 %v30
    %v154 = vpop.f32.mrf.mxu0
    %v155 = vadd.f32 %v69, %v154
    %v156 = vpop.f32.mrf.mxu0
    %v157 = vadd.f32 %v73, %v156
    %158 = vmatprep.mubr.f32.mxu0 0.0
    %159 = vmatmul.mubr.f32.gmra.mxu0 %v31
    %v160 = vpop.f32.mrf.mxu0
    %v161 = vadd.f32 %v69, %v160
    %v162 = vpop.f32.mrf.mxu0
    %v163 = vadd.f32 %v73, %v162
    %164 = vdwg.mxu0
    %vm165 = vcmp.gt.f32.partialorder %v143, 0.0
    %vm166 = vcmp.gt.f32.partialorder %v145, 0.0
    %vm167 = vcmp.gt.f32.partialorder %v149, 0.0
    %vm168 = vcmp.gt.f32.partialorder %v151, 0.0
    %vm169 = vcmp.gt.f32.partialorder %v155, 0.0
    %vm170 = vcmp.gt.f32.partialorder %v157, 0.0
    %vm171 = vcmp.gt.f32.partialorder %v161, 0.0
    %vm172 = vcmp.gt.f32.partialorder %v163, 0.0
    %v173 = vmul.f32 %v143, 0.01
    %v174 = vmul.f32 %v145, 0.01
    %v175 = vmul.f32 %v149, 0.01
    %v176 = vmul.f32 %v151, 0.01
    %v177 = vmul.f32 %v155, 0.01
    %v178 = vmul.f32 %v157, 0.01
    %v179 = vmul.f32 %v161, 0.01
    %v180 = vmul.f32 %v163, 0.01
    %v181 = vsel %vm165, %v143, %v173
    %v182 = vsel %vm166, %v145, %v174
    %v183 = vsel %vm167, %v149, %v175
    %v184 = vsel %vm168, %v151, %v176
    %v185 = vsel %vm169, %v155, %v177
    %v186 = vsel %vm170, %v157, %v178
    %v187 = vsel %vm171, %v161, %v179
    %v188 = vsel %vm172, %v163, %v180
    %v189 = vld [vmem:[%s3] sm:$0xff]
    %v190 = vld [vmem:[%s3 + $0x8] sm:$0xff]
    %v191 = vld [vmem:[%s3 + $0x10] sm:$0xff]
    %v192 = vld [vmem:[%s3 + $0x18] sm:$0xff]
    %v193 = vld [vmem:[%s3 + $0x20] sm:$0xff]
    %v194 = vld [vmem:[%s3 + $0x28] sm:$0xff]
    %v195 = vld [vmem:[%s3 + $0x30] sm:$0xff]
    %v196 = vld [vmem:[%s3 + $0x38] sm:$0xff]
    %v197 = vld [vmem:[%s3 + $0x40] sm:$0xff]
    %v198 = vld [vmem:[%s3 + $0x48] sm:$0xff]
    %v199 = vld [vmem:[%s3 + $0x50] sm:$0xff]
    %v200 = vld [vmem:[%s3 + $0x58] sm:$0xff]
    %v201 = vld [vmem:[%s3 + $0x60] sm:$0xff]
    %v202 = vld [vmem:[%s3 + $0x68] sm:$0xff]
    %v203 = vld [vmem:[%s3 + $0x70] sm:$0xff]
    %v204 = vld [vmem:[%s3 + $0x78] sm:$0xff]
    %v205 = vld [vmem:[%s3 + $0x80] sm:$0xff]
    %v206 = vld [vmem:[%s3 + $0x88] sm:$0xff]
    %v207 = vld [vmem:[%s3 + $0x90] sm:$0xff]
    %v208 = vld [vmem:[%s3 + $0x98] sm:$0xff]
    %v209 = vld [vmem:[%s3 + $0xa0] sm:$0xff]
    %v210 = vld [vmem:[%s3 + $0xa8] sm:$0xff]
    %v211 = vld [vmem:[%s3 + $0xb0] sm:$0xff]
    %v212 = vld [vmem:[%s3 + $0xb8] sm:$0xff]
    %v213 = vld [vmem:[%s3 + $0xc0] sm:$0xff]
    %v214 = vld [vmem:[%s3 + $0xc8] sm:$0xff]
    %v215 = vld [vmem:[%s3 + $0xd0] sm:$0xff]
    %v216 = vld [vmem:[%s3 + $0xd8] sm:$0xff]
    %v217 = vld [vmem:[%s3 + $0xe0] sm:$0xff]
    %v218 = vld [vmem:[%s3 + $0xe8] sm:$0xff]
    %v219 = vld [vmem:[%s3 + $0xf0] sm:$0xff]
    %v220 = vld [vmem:[%s3 + $0xf8] sm:$0xff]
    %v221 = vld [vmem:[%s4] sm:$0x1]
    %v223 = vlaneseq
    %v224 = vshrl.u32 %v223, 7
    %v225 = vsub.s32 0, %v224
    %v226 = vrot.slane %v221, %v225
    %228 = vmatprep.subr.mxu0 0.0
    %229 = vmatpush1.msra.mxu0 %v204
    %230 = vmatprep.subr.mxu0 0.0
    %231 = vmatpush1.msra.mxu0 %v203
    %232 = vmatprep.subr.mxu0 0.0
    %233 = vmatpush1.msra.mxu0 %v202
    %234 = vmatprep.subr.mxu0 0.0
    %235 = vmatpush1.msra.mxu0 %v201
    %236 = vmatprep.subr.mxu0 0.0
    %237 = vmatpush1.msra.mxu0 %v200
    %238 = vmatprep.subr.mxu0 0.0
    %239 = vmatpush1.msra.mxu0 %v199
    %240 = vmatprep.subr.mxu0 0.0
    %241 = vmatpush1.msra.mxu0 %v198
    %242 = vmatprep.subr.mxu0 0.0
    %243 = vmatpush1.msra.mxu0 %v197
    %244 = vmatprep.subr.mxu0 0.0
    %245 = vmatpush1.msra.mxu0 %v196
    %246 = vmatprep.subr.mxu0 0.0
    %247 = vmatpush1.msra.mxu0 %v195
    %248 = vmatprep.subr.mxu0 0.0
    %249 = vmatpush1.msra.mxu0 %v194
    %250 = vmatprep.subr.mxu0 0.0
    %251 = vmatpush1.msra.mxu0 %v193
    %252 = vmatprep.subr.mxu0 0.0
    %253 = vmatpush1.msra.mxu0 %v192
    %254 = vmatprep.subr.mxu0 0.0
    %255 = vmatpush1.msra.mxu0 %v191
    %256 = vmatprep.subr.mxu0 0.0
    %257 = vmatpush1.msra.mxu0 %v190
    %258 = vmatprep.subr.mxu0 0.0
    %259 = vmatpush1.msra.mxu0 %v189
    %260 = vmatprep.subr.mxu0 0.0
    %261 = vmatpush2.msra.mxu0 %v220
    %262 = vmatprep.subr.mxu0 0.0
    %263 = vmatpush2.msra.mxu0 %v219
    %264 = vmatprep.subr.mxu0 0.0
    %265 = vmatpush2.msra.mxu0 %v218
    %266 = vmatprep.subr.mxu0 0.0
    %267 = vmatpush2.msra.mxu0 %v217
    %268 = vmatprep.subr.mxu0 0.0
    %269 = vmatpush2.msra.mxu0 %v216
    %270 = vmatprep.subr.mxu0 0.0
    %271 = vmatpush2.msra.mxu0 %v215
    %272 = vmatprep.subr.mxu0 0.0
    %273 = vmatpush2.msra.mxu0 %v214
    %274 = vmatprep.subr.mxu0 0.0
    %275 = vmatpush2.msra.mxu0 %v213
    %276 = vmatprep.subr.mxu0 0.0
    %277 = vmatpush2.msra.mxu0 %v212
    %278 = vmatprep.subr.mxu0 0.0
    %279 = vmatpush2.msra.mxu0 %v211
    %280 = vmatprep.subr.mxu0 0.0
    %281 = vmatpush2.msra.mxu0 %v210
    %282 = vmatprep.subr.mxu0 0.0
    %283 = vmatpush2.msra.mxu0 %v209
    %284 = vmatprep.subr.mxu0 0.0
    %285 = vmatpush2.msra.mxu0 %v208
    %286 = vmatprep.subr.mxu0 0.0
    %287 = vmatpush2.msra.mxu0 %v207
    %288 = vmatprep.subr.mxu0 0.0
    %289 = vmatpush2.msra.mxu0 %v206
    %290 = vmatprep.subr.mxu0 0.0
    %291 = vmatpush2.msra.mxu0 %v205
    %292 = vmatprep.mubr.f32.mxu0 %v182
    %293 = vmatmul.mubr.f32.gmra.mxu0 %v181
    %v294 = vpop.f32.mrf.mxu0
    %v295 = vadd.f32 %v226, %v294
    %v296 = vpop.f32.mrf.mxu0
    %297 = vmatprep.mubr.f32.mxu0 %v184
    %298 = vmatmul.mubr.f32.gmra.mxu0 %v183
    %v299 = vpop.f32.mrf.mxu0
    %v300 = vadd.f32 %v226, %v299
    %v301 = vpop.f32.mrf.mxu0
    %302 = vmatprep.mubr.f32.mxu0 %v186
    %303 = vmatmul.mubr.f32.gmra.mxu0 %v185
    %v304 = vpop.f32.mrf.mxu0
    %v305 = vadd.f32 %v226, %v304
    %v306 = vpop.f32.mrf.mxu0
    %307 = vmatprep.mubr.f32.mxu0 %v188
    %308 = vmatmul.mubr.f32.gmra.mxu0 %v187
    %v309 = vpop.f32.mrf.mxu0
    %v310 = vadd.f32 %v226, %v309
    %v311 = vpop.f32.mrf.mxu0
    %312 = vdwg.mxu0
    %vm313 = vcmp.gt.f32.partialorder %v295, 0.0
    %vm314 = vcmp.gt.f32.partialorder %v300, 0.0
    %vm315 = vcmp.gt.f32.partialorder %v305, 0.0
    %vm316 = vcmp.gt.f32.partialorder %v310, 0.0
    %v317 = vmul.f32 %v295, 0.01
    %v318 = vmul.f32 %v300, 0.01
    %v319 = vmul.f32 %v305, 0.01
    %v320 = vmul.f32 %v310, 0.01
    %v321 = vsel %vm313, %v295, %v317
    %v322 = vsel %vm314, %v300, %v318
    %v323 = vsel %vm315, %v305, %v319
    %v324 = vsel %vm316, %v310, %v320
    %v325 = vld [vmem:[%s5] sm:$0xff]
    %v326 = vld [vmem:[%s5 + $0x8] sm:$0xff]
    %v327 = vld [vmem:[%s5 + $0x10] sm:$0xff]
    %v328 = vld [vmem:[%s5 + $0x18] sm:$0xff]
    %s329 = sld [smem:[#allocation2]]
    %v330 = vstv %s329
    %vm331 = vcmask 261120
    %v333 = vsel %vm331, %v321, 0
    %v336 = vsel %vm331, %v322, 0
    %v339 = vsel %vm331, %v323, 0
    %v342 = vsel %vm331, %v324, 0
    %344 = vmatprep.subr.mxu0 0.0
    %345 = vmatpush1.msra.mxu0 0.0
    %346 = vmatprep.subr.mxu0 0.0
    %347 = vmatpush1.msra.mxu0 0.0
    %348 = vmatprep.subr.mxu0 0.0
    %349 = vmatpush1.msra.mxu0 0.0
    %350 = vmatprep.subr.mxu0 0.0
    %351 = vmatpush1.msra.mxu0 0.0
    %352 = vmatprep.subr.mxu0 0.0
    %353 = vmatpush1.msra.mxu0 0.0
    %354 = vmatprep.subr.mxu0 0.0
    %355 = vmatpush1.msra.mxu0 0.0
    %356 = vmatprep.subr.mxu0 0.0
    %357 = vmatpush1.msra.mxu0 0.0
    %358 = vmatprep.subr.mxu0 0.0
    %359 = vmatpush1.msra.mxu0 0.0
    %360 = vmatprep.subr.mxu0 0.0
    %361 = vmatpush1.msra.mxu0 0.0
    %362 = vmatprep.subr.mxu0 0.0
    %363 = vmatpush1.msra.mxu0 0.0
    %364 = vmatprep.subr.mxu0 0.0
    %365 = vmatpush1.msra.mxu0 0.0
    %366 = vmatprep.subr.mxu0 0.0
    %367 = vmatpush1.msra.mxu0 0.0
    %368 = vmatprep.subr.mxu0 0.0
    %369 = vmatpush1.msra.mxu0 %v328
    %370 = vmatprep.subr.mxu0 0.0
    %371 = vmatpush1.msra.mxu0 %v327
    %372 = vmatprep.subr.mxu0 0.0
    %373 = vmatpush1.msra.mxu0 %v326
    %374 = vmatprep.subr.mxu0 0.0
    %375 = vmatpush1.msra.mxu0 %v325
    %376 = vmatprep.subr.mxu0 0.0
    %377 = vmatpush2.msra.mxu0 0.0
    %378 = vmatprep.subr.mxu0 0.0
    %379 = vmatpush2.msra.mxu0 0.0
    %380 = vmatprep.subr.mxu0 0.0
    %381 = vmatpush2.msra.mxu0 0.0
    %382 = vmatprep.subr.mxu0 0.0
    %383 = vmatpush2.msra.mxu0 0.0
    %384 = vmatprep.subr.mxu0 0.0
    %385 = vmatpush2.msra.mxu0 0.0
    %386 = vmatprep.subr.mxu0 0.0
    %387 = vmatpush2.msra.mxu0 0.0
    %388 = vmatprep.subr.mxu0 0.0
    %389 = vmatpush2.msra.mxu0 0.0
    %390 = vmatprep.subr.mxu0 0.0
    %391 = vmatpush2.msra.mxu0 0.0
    %392 = vmatprep.subr.mxu0 0.0
    %393 = vmatpush2.msra.mxu0 0.0
    %394 = vmatprep.subr.mxu0 0.0
    %395 = vmatpush2.msra.mxu0 0.0
    %396 = vmatprep.subr.mxu0 0.0
    %397 = vmatpush2.msra.mxu0 0.0
    %398 = vmatprep.subr.mxu0 0.0
    %399 = vmatpush2.msra.mxu0 0.0
    %400 = vmatprep.subr.mxu0 0.0
    %401 = vmatpush2.msra.mxu0 0.0
    %402 = vmatprep.subr.mxu0 0.0
    %403 = vmatpush2.msra.mxu0 0.0
    %404 = vmatprep.subr.mxu0 0.0
    %405 = vmatpush2.msra.mxu0 0.0
    %406 = vmatprep.subr.mxu0 0.0
    %407 = vmatpush2.msra.mxu0 0.0
    %408 = vmatprep.mubr.f32.mxu0 0.0
    %409 = vmatmul.mubr.f32.gmra.mxu0 %v333
    %v410 = vpop.f32.mrf.mxu0
    %v411 = vadd.f32 %v330, %v410
    %v412 = vpop.f32.mrf.mxu0
    %413 = vmatprep.mubr.f32.mxu0 0.0
    %414 = vmatmul.mubr.f32.gmra.mxu0 %v336
    %v415 = vpop.f32.mrf.mxu0
    %v416 = vadd.f32 %v330, %v415
    %v417 = vpop.f32.mrf.mxu0
    %418 = vmatprep.mubr.f32.mxu0 0.0
    %419 = vmatmul.mubr.f32.gmra.mxu0 %v339
    %v420 = vpop.f32.mrf.mxu0
    %v421 = vadd.f32 %v330, %v420
    %v422 = vpop.f32.mrf.mxu0
    %423 = vmatprep.mubr.f32.mxu0 0.0
    %424 = vmatmul.mubr.f32.gmra.mxu0 %v342
    %v425 = vpop.f32.mrf.mxu0
    %v426 = vadd.f32 %v330, %v425
    %v427 = vpop.f32.mrf.mxu0
    %428 = vdwg.mxu0
    %vm429 = vcmask 31744
    %430 = vst.msk [vmem:[#allocation3] sm:$0xff] %vm429, %v411
    %431 = vst.msk [vmem:[#allocation3 + $0x8] sm:$0xff] %vm429, %v416
    %432 = vst.msk [vmem:[#allocation3 + $0x10] sm:$0xff] %vm429, %v421
    %433 = vst.msk [vmem:[#allocation3 + $0x18] sm:$0xff] %vm429, %v426
    // Predicated region
    $region30: #{tpu_custom_call.1} parent=1 // pred_check
      _
    $region31: #{tpu_custom_call.1} parent=1 // pred_check_branch
      %435 = sbr.rel (0) target = $region33
    $region32: #{tpu_custom_call.1} parent=1 // pred_region
      %s437 = ssub.s32 512, 32
      %438 = vsyncadd [#allocation4], %s437
      %s439 = sshll.u32 [#allocation3], 4
      %s440 = int_to_ptr.vmem [resolvable:$true] %s439
      %445 = dma.vmem_to_hbm [thread:$0]  %s440, 32, %s7, [#allocation4], 32, 32, 2
    $region33: #{tpu_custom_call.1} parent=1 // pred_fallthru
      _
    // Predicated region
    $region34: #{tpu_custom_call.1} parent=1 // pred_check
      _
    $region35: #{tpu_custom_call.1} parent=1 // pred_check_branch
      %447 = sbr.rel (0) target = $region37
    $region36: #{tpu_custom_call.1} parent=1 // pred_region
      %448 = dma.done [#allocation4], 512
    $region37: #{tpu_custom_call.1} parent=1 // pred_fallthru
      _
    %449 = vsyncpa [#allocation4], 1

</llo_original>
